<compile_context>
chip_gen: v7x
topology: tpu7x:2x2x1
jax: 0.10.0
libtpu: 0.0.40
codegen_flags: <defaults>
</compile_context>

<pallas_src>
import math

import jax
import jax.numpy as jnp
from jax.experimental import pallas as pl
from jax.experimental.pallas import tpu as pltpu


_COMPILER_PARAMS = pltpu.CompilerParams(
    dimension_semantics=("parallel",),      # megacore-shardable row axis (v7x)
    vmem_limit_bytes=32 * 1024 * 1024,      # safe ceiling for v5e/v6e/v7x
)


def _round_up(x, n):
    return ((x + n - 1) // n) * n


def _pick_row_tile(m):
    # Production-sized M: 256-row tiles (MXU-friendly on v6e/v7x, >=2 grid
    # steps for pipelining / megacore).  Toy M: split into two tiles so the
    # pipelined / parallel path is still exercised.
    if m >= 512:
        return 256
    return max(8, _round_up((m + 1) // 2, 8))


# ----------------------------------------------------------------------------
# Pallas kernels
# ----------------------------------------------------------------------------
def _linear_kernel(x_ref, w_ref, b_ref, o_ref):
    """1x1 conv == per-pixel linear: (tile, Cin) @ (Cin, Cout) + b."""
    o_ref[...] = (
        jnp.dot(x_ref[...], w_ref[...], preferred_element_type=jnp.float32)
        + b_ref[...]
    )


def _hoiclip_heads_kernel(
    h_ref, o_ref, i_ref,                   # (tile, hidden) bf16, (tile, hidden) bf16, (tile, ce_pad) bf16
    w_sq_ref,                              # (4, hidden, hidden) bf16: hum w1,w2 / obj w1,w2
    w_box3_ref,                            # (2, hidden, OW) bf16: hum/obj final bbox layers, lane-placed
    vw1_ref, vw2_ref, vw3_ref,             # inter2verb MLP weights bf16 (vw1 K padded to ce_pad)
    wofc_ref,                              # (hidden, ce) bf16: obj_class_fc Linear
    w_vis_ref,                             # (ce_pad, OW) bf16: visual_projection (scale folded, lane-placed)
    w_ovh_ref,                             # (2, ce, OW) bf16: [obj_visual_projection, verb->hoi] scale-folded
    vec_ref,                               # (12, Wmax) f32: all biases / LayerNorm vectors
    packed_ref, inter_ref,                 # outputs: (tile, OW) f32, (tile, ce_pad) f32
):
    hidden = h_ref.shape[1]
    ce = vw3_ref.shape[1]
    c2 = vw1_ref.shape[1]
    ow = packed_ref.shape[1]

    vecs = vec_ref[...]                    # one small f32 load, sliced statically below
    h = h_ref[...]
    o = o_ref[...]
    i_pad = i_ref[...]
    cdt = h.dtype                          # bf16 compute dtype for MXU operands

    def dotf(a, b):
        return jnp.dot(a, b, preferred_element_type=jnp.float32)

    def mlp_hidden(x, w1, b1, w2, b2):
        t = jnp.maximum(dotf(x, w1) + b1, 0.0).astype(cdt)
        t = jnp.maximum(dotf(t, w2) + b2, 0.0).astype(cdt)
        return t

    def l2n(x):
        # rsqrt (EUP slot) instead of divide-by-sqrt; tiny eps guards zero rows.
        return x * jax.lax.rsqrt(jnp.sum(x * x, axis=-1, keepdims=True) + 1e-12)

    # ---- bbox heads: hum -> lanes [0,4), obj -> lanes [4,8).  Unused lanes of
    # the bias slab hold -30 so sigmoid underflows to 0 (no iota/where mask).
    hh = mlp_hidden(h, w_sq_ref[0], vecs[0:1, :hidden], w_sq_ref[1], vecs[1:2, :hidden])
    oh = mlp_hidden(o, w_sq_ref[2], vecs[2:3, :hidden], w_sq_ref[3], vecs[3:4, :hidden])
    box_pre = dotf(hh, w_box3_ref[0]) + dotf(oh, w_box3_ref[1]) + vecs[10:11, :ow]
    box_term = jax.nn.sigmoid(box_pre)

    # ---- obj class head: Linear + LayerNorm -> L2 norm -> projection
    # (obj_logit_scale pre-folded into w_ovh[0] and the bias slab).
    oc = dotf(o, wofc_ref[...]) + vecs[7:8, :ce]
    mu = jnp.mean(oc, axis=-1, keepdims=True)
    var = jnp.mean((oc - mu) ** 2, axis=-1, keepdims=True)
    oc = (oc - mu) * jax.lax.rsqrt(var + 1e-5) * vecs[8:9, :ce] + vecs[9:10, :ce]
    ocn = l2n(oc).astype(cdt)

    # ---- inter2verb MLP + HOI head (logit_scale / verb_weight / verb2hoi folded)
    vh = mlp_hidden(i_pad, vw1_ref[...], vecs[4:5, :c2], vw2_ref[...], vecs[5:6, :c2])
    verb = dotf(vh, vw3_ref[...]) + vecs[6:7, :ce]
    inter_n = l2n(i_pad.astype(jnp.float32))         # f32, lane-padded (zeros beyond ce)
    verb_n = l2n(verb).astype(cdt)

    cls_term = (dotf(inter_n.astype(cdt), w_vis_ref[...])
                + dotf(ocn, w_ovh_ref[0])
                + dotf(verb_n, w_ovh_ref[1])
                + vecs[11:12, :ow])

    # Each term is non-zero only in its own lane range -> summing packs the slab.
    packed_ref[...] = box_term + cls_term
    inter_ref[...] = inter_n


# ----------------------------------------------------------------------------
# Wrappers (pallas_call plumbing)
# ----------------------------------------------------------------------------
def input_proj_1x1(x_nhwc, w, b, *, tile_rows=None):
    """Conv2d(Cin, Cout, kernel_size=1) on an NHWC map, row-tiled + pipelined."""
    bsz, hh, ww, cin = x_nhwc.shape
    cout = w.shape[1]
    m = bsz * hh * ww
    if tile_rows is None:
        tile_rows = _pick_row_tile(m)
    m_pad = _round_up(m, tile_rows)
    x2d = x_nhwc.reshape(m, cin)
    if m_pad != m:
        x2d = jnp.pad(x2d, ((0, m_pad - m), (0, 0)))
    y = pl.pallas_call(
        _linear_kernel,
        out_shape=jax.ShapeDtypeStruct((m_pad, cout), jnp.float32),
        grid=(m_pad // tile_rows,),
        in_specs=[
            pl.BlockSpec((tile_rows, cin), lambda i: (i, 0)),
            pl.BlockSpec((cin, cout), lambda i: (0, 0)),
            pl.BlockSpec((1, cout), lambda i: (0, 0)),
        ],
        out_specs=pl.BlockSpec((tile_rows, cout), lambda i: (i, 0)),
        compiler_params=_COMPILER_PARAMS,
    )(x2d.astype(jnp.bfloat16), w.astype(jnp.bfloat16), b)
    return y[:m].reshape(bsz, hh, ww, cout)


def hoiclip_heads(h2d, o2d, i2d_pad, params, *, out_width, tile_m=None):
    """Single fused pallas_call for all HOICLIP prediction heads, row-tiled."""
    m, hidden = h2d.shape
    ce_pad = i2d_pad.shape[1]
    if tile_m is None:
        tile_m = _pick_row_tile(m)
    m_pad = _round_up(m, tile_m)
    if m_pad != m:
        rp = ((0, m_pad - m), (0, 0))
        h2d = jnp.pad(h2d, rp)
        o2d = jnp.pad(o2d, rp)
        i2d_pad = jnp.pad(i2d_pad, rp)

    # bf16 at the pallas_call boundary; accumulation / norms stay f32 inside
    # the kernel.  The coalesced bias/LayerNorm slab (last param) stays f32.
    acts = [a.astype(jnp.bfloat16) for a in (h2d, o2d, i2d_pad)]
    wq = [p.astype(jnp.bfloat16) for p in params[:-1]] + [params[-1]]

    in_specs = (
        [pl.BlockSpec((tile_m, hidden), lambda i: (i, 0)),
         pl.BlockSpec((tile_m, hidden), lambda i: (i, 0)),
         pl.BlockSpec((tile_m, ce_pad), lambda i: (i, 0))]
        # weights: constant block index -> resident across grid steps
        + [pl.BlockSpec(p.shape, lambda i, n=p.ndim: (0,) * n) for p in wq]
    )

    packed, inter_n = pl.pallas_call(
        _hoiclip_heads_kernel,
        out_shape=(
            jax.ShapeDtypeStruct((m_pad, out_width), jnp.float32),
            jax.ShapeDtypeStruct((m_pad, ce_pad), jnp.float32),
        ),
        grid=(m_pad // tile_m,),
        in_specs=in_specs,
        out_specs=(
            pl.BlockSpec((tile_m, out_width), lambda i: (i, 0)),
            pl.BlockSpec((tile_m, ce_pad), lambda i: (i, 0)),
        ),
        compiler_params=_COMPILER_PARAMS,
    )(*acts, *wq)
    return packed[:m], inter_n[:m]


# ----------------------------------------------------------------------------
# Main
# ----------------------------------------------------------------------------
if __name__ == "__main__":
    key = jax.random.PRNGKey(0)
    ks = iter(jax.random.split(key, 40))

    # small, self-consistent configuration
    B, Cb, Hs, Ws = 2, 4, 8, 8          # backbone feature map
    hidden_dim = 32                     # transformer.d_model
    num_queries = 8
    dec_layers = 3
    clip_embed = 32                     # args.clip_embed_dim
    n_hoi = 24                          # len(hoi_text)   (600 for hico)
    n_verb = 16                         # verb classes    (117 for hico)
    n_obj = 12                          # num_obj_classes + 1
    verb_weight = 0.5

    def init(shape, k):
        fan_in = shape[0] if len(shape) > 1 else shape[-1]
        return jax.random.normal(k, shape, jnp.float32) / math.sqrt(fan_in)

    def mlp_params(din, dh, dout):
        return (init((din, dh), next(ks)), init((1, dh), next(ks)),
                init((dh, dh), next(ks)), init((1, dh), next(ks)),
                init((dh, dout), next(ks)), init((1, dout), next(ks)))

    # ---- parameters (shapes follow HOICLIP.__init__) ----
    w_proj = init((Cb, hidden_dim), next(ks))          # input_proj 1x1 conv
    b_proj = init((1, hidden_dim), next(ks))
    hum_bbox_p = mlp_params(hidden_dim, hidden_dim, 4)
    obj_bbox_p = mlp_params(hidden_dim, hidden_dim, 4)
    inter2verb_p = mlp_params(clip_embed, clip_embed // 2, clip_embed)
    w_objfc = init((hidden_dim, clip_embed), next(ks))  # obj_class_fc Linear
    b_objfc = init((1, clip_embed), next(ks))
    gamma = jnp.ones((1, clip_embed), jnp.float32)      # obj_class_fc LayerNorm
    beta = jnp.zeros((1, clip_embed), jnp.float32)
    w_objvis = init((clip_embed, n_obj), next(ks))      # obj_visual_projection (unit columns)
    w_objvis = w_objvis / jnp.linalg.norm(w_objvis, axis=0, keepdims=True)
    b_objvis = init((1, n_obj), next(ks))
    w_vis = init((clip_embed, n_hoi), next(ks))          # visual_projection (unit columns)
    w_vis = w_vis / jnp.linalg.norm(w_vis, axis=0, keepdims=True)
    b_vis = init((1, n_hoi), next(ks))
    w_verb = init((clip_embed, n_verb), next(ks))        # verb_projection (no bias)
    # verb2hoi_proj: binary verb->hoi assignment (synthetic HOI_IDX_TO_ACT_IDX)
    verb2hoi = jnp.zeros((n_verb, n_hoi), jnp.float32).at[
        jnp.arange(n_hoi) % n_verb, jnp.arange(n_hoi)].set(1.0)
    logit_scale = float(math.exp(math.log(1.0 / 0.07)))
    obj_logit_scale = float(math.exp(math.log(1.0 / 0.07)))

    # ---- synthetic inputs ----
    # TODO(synk): backbone, DETR-style transformer, CLIP image/text encoders and
    # the LLM text-model branches are external modules; their outputs (h_hs,
    # o_hs, inter_hs, clip features) are emulated with deterministic tensors.
    src_nhwc = jax.random.normal(next(ks), (B, Hs, Ws, Cb), jnp.float32)
    h_hs = jax.random.normal(next(ks), (dec_layers, B, num_queries, hidden_dim), jnp.float32)
    o_hs = jax.random.normal(next(ks), (dec_layers, B, num_queries, hidden_dim), jnp.float32)
    inter_hs = jax.random.normal(next(ks), (dec_layers, B, num_queries, clip_embed), jnp.float32)
    clip_cls_feature = jax.random.normal(next(ks), (B, clip_embed), jnp.float32)
    clip_hoi_score = jax.random.normal(next(ks), (B, n_hoi), jnp.float32)
    clip_visual = jax.random.normal(next(ks), (B, 49, clip_embed), jnp.float32)

    # ---- input_proj 1x1 conv (NHWC end-to-end, row-tiled) ----
    proj_src = input_proj_1x1(src_nhwc, w_proj, b_proj)   # (B, Hs, Ws, hidden_dim)

    # ---- packed output lane layout & coalesced / scale-folded weights ----
    C_SUB, C_OBJ_BOX, C_OBJ_CLS = 0, 4, 8
    C_HOI = C_OBJ_CLS + n_obj                 # 20
    used = C_HOI + n_hoi                      # 44
    OW = _round_up(used, 128)                 # 128 -> unmasked lane-dense store
    ce_pad = _round_up(clip_embed, 128)       # lane-dense inter output too

    def place_w(w, start):
        return jnp.zeros((w.shape[0], OW), jnp.float32).at[
            :, start:start + w.shape[1]].set(w)

    # final bbox layers lane-placed; unused lanes get a -30 bias so sigmoid -> 0
    w_box3 = jnp.stack([place_w(hum_bbox_p[4], C_SUB),
                        place_w(obj_bbox_p[4], C_OBJ_BOX)])            # (2, hidden, OW)
    b_box = jnp.full((OW,), -30.0, jnp.float32)
    b_box = b_box.at[C_SUB:C_SUB + 4].set(hum_bbox_p[5].reshape(-1))
    b_box = b_box.at[C_OBJ_BOX:C_OBJ_BOX + 4].set(obj_bbox_p[5].reshape(-1))

    # logit scales / verb_weight / verb2hoi folded into the projection weights
    w_obj_sc = obj_logit_scale * place_w(w_objvis, C_OBJ_CLS)          # (ce, OW)
    w_vis_sc = logit_scale * place_w(w_vis, C_HOI)                     # (ce, OW)
    w_vis_sc = jnp.pad(w_vis_sc, ((0, ce_pad - clip_embed), (0, 0)))   # (ce_pad, OW)
    w_vh_sc = logit_scale * verb_weight * place_w(w_verb @ verb2hoi, C_HOI)
    w_ovh = jnp.stack([w_obj_sc, w_vh_sc])                             # (2, ce, OW)
    b_cls = jnp.zeros((OW,), jnp.float32)
    b_cls = b_cls.at[C_OBJ_CLS:C_OBJ_CLS + n_obj].set(obj_logit_scale * b_objvis.reshape(-1))
    b_cls = b_cls.at[C_HOI:C_HOI + n_hoi].set(logit_scale * b_vis.reshape(-1))

    w_sq = jnp.stack([hum_bbox_p[0], hum_bbox_p[2],
                      obj_bbox_p[0], obj_bbox_p[2]])                   # (4, hidden, hidden)
    vw1_pad = jnp.pad(inter2verb_p[0], ((0, ce_pad - clip_embed), (0, 0)))

    # all small bias / LayerNorm vectors coalesced into ONE f32 operand
    wmax = max(hidden_dim, clip_embed // 2, clip_embed, OW)

    def row(v):
        v = v.reshape(-1)
        return jnp.pad(v, (0, wmax - v.shape[0]))

    vecs = jnp.stack([
        row(hum_bbox_p[1]), row(hum_bbox_p[3]),          # 0,1  hum bbox b1,b2
        row(obj_bbox_p[1]), row(obj_bbox_p[3]),          # 2,3  obj bbox b1,b2
        row(inter2verb_p[1]), row(inter2verb_p[3]),      # 4,5  verb b1,b2
        row(inter2verb_p[5]),                            # 6    verb b3
        row(b_objfc), row(gamma), row(beta),             # 7,8,9  obj_class_fc
        row(b_box), row(b_cls),                          # 10,11  packed-slab biases
    ])                                                   # (12, wmax) f32

    params = (w_sq, w_box3, vw1_pad, inter2verb_p[2], inter2verb_p[4],
              w_objfc, w_vis_sc, w_ovh, vecs)

    # ---- fused heads over all (dec_layers * B * num_queries) rows ----
    M = dec_layers * B * num_queries
    h2d = h_hs.reshape(M, hidden_dim)
    o2d = o_hs.reshape(M, hidden_dim)
    i2d = inter_hs.reshape(M, clip_embed)
    i2d_pad = jnp.pad(i2d, ((0, 0), (0, ce_pad - clip_embed)))

    packed, inter_norm_pad = hoiclip_heads(h2d, o2d, i2d_pad, params, out_width=OW)
    inter_norm = inter_norm_pad[:, :clip_embed]

    # free wrapper-side unpacking of the lane-dense slab
    sub_coord = packed[:, C_SUB:C_SUB + 4]
    obj_coord = packed[:, C_OBJ_BOX:C_OBJ_BOX + 4]
    obj_logits = packed[:, C_OBJ_CLS:C_OBJ_CLS + n_obj]
    hoi_logits = packed[:, C_HOI:C_HOI + n_hoi]

    outputs_sub_coord = sub_coord.reshape(dec_layers, B, num_queries, 4)
    outputs_obj_coord = obj_coord.reshape(dec_layers, B, num_queries, 4)
    outputs_obj_class = obj_logits.reshape(dec_layers, B, num_queries, n_obj)
    outputs_hoi_class = hoi_logits.reshape(dec_layers, B, num_queries, n_hoi)
    inter_hs_norm = inter_norm.reshape(dec_layers, B, num_queries, clip_embed)

    out = {
        "pred_hoi_logits": outputs_hoi_class[-1],
        "pred_obj_logits": outputs_obj_class[-1],
        "pred_sub_boxes": outputs_sub_coord[-1],
        "pred_obj_boxes": outputs_obj_coord[-1],
        "clip_visual": clip_visual,
        "clip_cls_feature": clip_cls_feature,
        "hoi_feature": inter_hs_norm[-1],
        "clip_logits": clip_hoi_score,
        "proj_src": proj_src,            # NHWC (transformer input is an external TODO)
    }
    jax.block_until_ready(out)

    # ---- correctness vs. pure-JAX f32 reference (un-fused, PyTorch semantics).
    # The kernel runs bf16 operands with f32 accumulation, so tolerances are
    # scaled to the output magnitude.
    def mlp3_ref(x, p):
        w1, b1, w2, b2, w3, b3 = p
        t = jax.nn.relu(x @ w1 + b1)
        t = jax.nn.relu(t @ w2 + b2)
        return t @ w3 + b3

    sub_ref = jax.nn.sigmoid(mlp3_ref(h2d, hum_bbox_p))
    objb_ref = jax.nn.sigmoid(mlp3_ref(o2d, obj_bbox_p))
    verb_ref = mlp3_ref(i2d, inter2verb_p)

    oc_ref = o2d @ w_objfc + b_objfc
    mu = jnp.mean(oc_ref, -1, keepdims=True)
    var = jnp.mean((oc_ref - mu) ** 2, -1, keepdims=True)
    oc_ref = (oc_ref - mu) / jnp.sqrt(var + 1e-5) * gamma + beta
    oc_ref = oc_ref / jnp.linalg.norm(oc_ref, axis=-1, keepdims=True)
    obj_cls_ref = obj_logit_scale * (oc_ref @ w_objvis + b_objvis)

    inter_n_ref = i2d / jnp.linalg.norm(i2d, axis=-1, keepdims=True)
    verb_n_ref = verb_ref / jnp.linalg.norm(verb_ref, axis=-1, keepdims=True)
    hoi_ref = (logit_scale * (inter_n_ref @ w_vis + b_vis)
               + (logit_scale * (verb_n_ref @ w_verb)) @ verb2hoi * verb_weight)
    proj_ref = src_nhwc.reshape(-1, Cb) @ w_proj + b_proj

    def close(actual, ref, tol):
        scale = jnp.maximum(jnp.max(jnp.abs(ref)), 1.0)
        return bool(jnp.max(jnp.abs(actual - ref)) <= tol * scale)

    ok = True
    ok &= close(proj_src.reshape(-1, hidden_dim), proj_ref, 1e-2)
    ok &= close(sub_coord, sub_ref, 3e-2)
    ok &= close(obj_coord, objb_ref, 3e-2)
    ok &= close(obj_logits, obj_cls_ref, 3e-2)
    ok &= close(hoi_logits, hoi_ref, 3e-2)
    ok &= close(inter_norm, inter_n_ref, 1e-2)

    if not ok:
        raise SystemExit("mismatch vs reference")
    print("KERNEL_OK")
</pallas_src>

<mosaic_0001>
module attributes {stable_mosaic.version = 11 : i64} {
  func.func @_linear_kernel(%arg0: i32, %arg1: memref<64x4xbf16, #tpu.memory_space<vmem>>, %arg2: memref<4x32xbf16, #tpu.memory_space<vmem>>, %arg3: memref<1x32xf32, #tpu.memory_space<vmem>>, %arg4: memref<64x32xf32, #tpu.memory_space<vmem>>) attributes {dimension_semantics = [#tpu.dimension_semantics<parallel>], iteration_bounds = array<i64: 2>, scalar_prefetch = 0 : i64, scratch_operands = 0 : i64, tpu.core_type = #tpu.core_type<tc>, window_params = [{transform_indices = @transform_0, window_bounds = array<i64: 64, 4>}, {pipeline_mode = #tpu.pipeline_mode<synchronous>, transform_indices = @transform_1, window_bounds = array<i64: 4, 32>}, {pipeline_mode = #tpu.pipeline_mode<synchronous>, transform_indices = @transform_2, window_bounds = array<i64: 1, 32>}, {transform_indices = @transform_3, window_bounds = array<i64: 64, 32>}]} {
    %c0 = arith.constant 0 : index
    %c0_0 = arith.constant 0 : index
    %0 = vector.load %arg1[%c0, %c0_0] : memref<64x4xbf16, #tpu.memory_space<vmem>>, vector<64x4xbf16>
    %c0_1 = arith.constant 0 : index
    %c0_2 = arith.constant 0 : index
    %1 = vector.load %arg2[%c0_1, %c0_2] : memref<4x32xbf16, #tpu.memory_space<vmem>>, vector<4x32xbf16>
    %cst = arith.constant dense<0.000000e+00> : vector<64x32xf32>
    %2 = tpu.matmul %0, %1, %cst {dimension_numbers = #tpu.dot_dimension_numbers<[1], [0], [0], [1], [0, 0, 1, 1], [], []>} : vector<64x4xbf16>, vector<4x32xbf16>, vector<64x32xf32> -> vector<64x32xf32>
    %c0_3 = arith.constant 0 : index
    %c0_4 = arith.constant 0 : index
    %3 = vector.load %arg3[%c0_3, %c0_4] : memref<1x32xf32, #tpu.memory_space<vmem>>, vector<1x32xf32>
    %4 = vector.broadcast %3 : vector<1x32xf32> to vector<64x32xf32>
    %5 = arith.addf %2, %4 : vector<64x32xf32>
    %c0_5 = arith.constant 0 : index
    %c0_6 = arith.constant 0 : index
    %6 = vector.load %arg4[%c0_5, %c0_6] : memref<64x32xf32, #tpu.memory_space<vmem>>, vector<64x32xf32>
    tpu.vector_store %arg4[%c0_5, %c0_6], %5 {strides = array<i32>} : memref<64x32xf32, #tpu.memory_space<vmem>>, vector<64x32xf32>,
    return
  }
  func.func @transform_0(%arg0: i32) -> (i32, i32) {
    %c0_i32 = arith.constant 0 : i32
    %c0_i32_0 = arith.constant 0 : i32
    return %arg0, %c0_i32 : i32, i32
  }
  func.func @transform_1(%arg0: i32) -> (i32, i32) {
    %c0_i32 = arith.constant 0 : i32
    %c0_i32_0 = arith.constant 0 : i32
    %c0_i32_1 = arith.constant 0 : i32
    return %c0_i32, %c0_i32_0 : i32, i32
  }
  func.func @transform_2(%arg0: i32) -> (i32, i32) {
    %c0_i32 = arith.constant 0 : i32
    %c0_i32_0 = arith.constant 0 : i32
    %c0_i32_1 = arith.constant 0 : i32
    return %c0_i32, %c0_i32_0 : i32, i32
  }
  func.func @transform_3(%arg0: i32) -> (i32, i32) {
    %c0_i32 = arith.constant 0 : i32
    %c0_i32_0 = arith.constant 0 : i32
    return %arg0, %c0_i32 : i32, i32
  }
}

</mosaic_0001>

<llo_original>
// kernel: tpu_custom_call.1
$region0: #{tpu_custom_call.1}
  #allocation0 [shape = 'u32[]', space=smem, size = 0x4, offset = 0x4, fixed_abs, tag = 'smem constant byte address 0x4 - core index']
  #allocation1 [shape = 'u32[144,128]{1,0:T(1,128)}', space=vmem, size = 0x12000, scoped, tag = 'internal scratch']
  %s0 = inlined_call_operand.vmem [shape: bf16[128,4], index: 0, kind: input, shape index: {}]
  %s1 = inlined_call_operand.vmem [shape: bf16[4,32], index: 1, kind: input, shape index: {}]
  %s2 = inlined_call_operand.vmem [shape: f32[1,32], index: 2, kind: input, shape index: {}]
  %s3 = inlined_call_operand.vmem [shape: f32[128,32], index: 3, kind: output, shape index: {}]
  %s4 = sld [smem:[#allocation0]]
  $region45: #{tpu_custom_call.1} parent=0
    _
  %s6 = ssub.s32 1, %s4
  %s7 = scalar_select 0, %s6, %s4
  loop: start=0, step=1, limit=4
  $region2: #{tpu_custom_call.1} parent=0 // loop_pre_header
    _
  $region3: #{tpu_custom_call.1} parent=0 // loop_header
    %s9 = sphi 0, %s13
    %p10 = scmp.ge.s32.totalorder %s9, 4
    %s19 = sphi 0, %s21
    %s22 = sphi 0, %s19
    %s23 = sphi 0, %s22
    %s39 = sphi 0, %s23
    %s43 = sphi 0, %s43
    %s45 = sphi 0, %s43
    %s46 = sphi 0, %s45
    %s60 = sphi 0, %s46
    %s64 = sphi 0, %s64
    %s66 = sphi 0, %s64
    %s67 = sphi 0, %s66
    %s81 = sphi 0, %s67
    %s87 = sphi 0, %s89
    %s90 = sphi 0, %s87
    %s91 = sphi 0, %s90
    %s107 = sphi 0, %s91
  $region4: #{tpu_custom_call.1} parent=0 // loop_header_branch
    %12 = sbr.rel (%p10) target = $region8
  $region5: #{tpu_custom_call.1} parent=0 // loop_body
    %s14 = ssub.s32 %s9, 1
    %s15 = ssub.s32 %s9, 2
    %s16 = sadd.s32 %s9, 1
    %s17 = ssub.s32 %s9, %s16
    %p18 = scmp.eq.s32.totalorder %s17, 0
    %s20 = sadd.s32 %s19, 1
    %s21 = scalar_select %p18, %s19, %s20
    %p24 = pneg %p18
    %p25 = scmp.eq.s32.totalorder %s9, 1
    %p26 = por %p24, %p25
    %p27 = scmp.ne.s32.totalorder %s19, %s22
    %p28 = scmp.eq.s32.totalorder %s9, 0
    %p29 = por %p27, %p28
    %p30 = scmp.ne.s32.totalorder %s19, %s22
    %p31 = scmp.eq.s32.totalorder %s14, 1
    %p32 = por %p30, %p31
    %p33 = scmp.ne.s32.totalorder %s22, %s23
    %p34 = scmp.eq.s32.totalorder %s14, 0
    %p35 = por %p33, %p34
    %p36 = scmp.ne.s32.totalorder %s22, %s23
    %p37 = scmp.eq.s32.totalorder %s15, 1
    %p38 = por %p36, %p37
    %p40 = scmp.ne.s32.totalorder %s23, %s39
    %p41 = scmp.eq.s32.totalorder %s15, 0
    %p42 = por %p40, %p41
    %s44 = sadd.s32 %s43, 1
    %p47 = scmp.eq.s32.totalorder %s9, 1
    %p48 = scmp.ne.s32.totalorder %s43, %s45
    %p49 = scmp.eq.s32.totalorder %s9, 0
    %p50 = por %p48, %p49
    %p51 = scmp.ne.s32.totalorder %s43, %s45
    %p52 = scmp.eq.s32.totalorder %s14, 1
    %p53 = por %p51, %p52
    %p54 = scmp.ne.s32.totalorder %s45, %s46
    %p55 = scmp.eq.s32.totalorder %s14, 0
    %p56 = por %p54, %p55
    %p57 = scmp.ne.s32.totalorder %s45, %s46
    %p58 = scmp.eq.s32.totalorder %s15, 1
    %p59 = por %p57, %p58
    %p61 = scmp.ne.s32.totalorder %s46, %s60
    %p62 = scmp.eq.s32.totalorder %s15, 0
    %p63 = por %p61, %p62
    %s65 = sadd.s32 %s64, 1
    %p68 = scmp.eq.s32.totalorder %s9, 1
    %p69 = scmp.ne.s32.totalorder %s64, %s66
    %p70 = scmp.eq.s32.totalorder %s9, 0
    %p71 = por %p69, %p70
    %p72 = scmp.ne.s32.totalorder %s64, %s66
    %p73 = scmp.eq.s32.totalorder %s14, 1
    %p74 = por %p72, %p73
    %p75 = scmp.ne.s32.totalorder %s66, %s67
    %p76 = scmp.eq.s32.totalorder %s14, 0
    %p77 = por %p75, %p76
    %p78 = scmp.ne.s32.totalorder %s66, %s67
    %p79 = scmp.eq.s32.totalorder %s15, 1
    %p80 = por %p78, %p79
    %p82 = scmp.ne.s32.totalorder %s67, %s81
    %p83 = scmp.eq.s32.totalorder %s15, 0
    %p84 = por %p82, %p83
    %s85 = ssub.s32 %s9, %s16
    %p86 = scmp.eq.s32.totalorder %s85, 0
    %s88 = sadd.s32 %s87, 1
    %s89 = scalar_select %p86, %s87, %s88
    %p92 = pneg %p86
    %p93 = scmp.eq.s32.totalorder %s9, 1
    %p94 = por %p92, %p93
    %p95 = scmp.ne.s32.totalorder %s87, %s90
    %p96 = scmp.eq.s32.totalorder %s9, 0
    %p97 = por %p95, %p96
    %p98 = scmp.ne.s32.totalorder %s87, %s90
    %p99 = scmp.eq.s32.totalorder %s14, 1
    %p100 = por %p98, %p99
    %p101 = scmp.ne.s32.totalorder %s90, %s91
    %p102 = scmp.eq.s32.totalorder %s14, 0
    %p103 = por %p101, %p102
    %p104 = scmp.ne.s32.totalorder %s90, %s91
    %p105 = scmp.eq.s32.totalorder %s15, 1
    %p106 = por %p104, %p105
    %p108 = scmp.ne.s32.totalorder %s91, %s107
    %p109 = scmp.eq.s32.totalorder %s15, 0
    %p110 = por %p108, %p109
    %p111 = scmp.le.s32.totalorder 1, %s9
    %p112 = scmp.lt.s32.totalorder %s9, 3
    %p113 = pnand %p111, %p112
    %p114 = pneg %p113
    // Predicated region
    $region9: #{tpu_custom_call.1} parent=5 // pred_check
      _
    $region10: #{tpu_custom_call.1} parent=5 // pred_check_branch
      %116 = sbr.rel (%p113) target = $region12
    $region11: #{tpu_custom_call.1} parent=5 // pred_region
      %s117 = ssub.s32 %s9, 1
      // Predicated region
      $region13: #{tpu_custom_call.1} parent=11 // pred_check
        %p118 = pneg %p56
      $region14: #{tpu_custom_call.1} parent=11 // pred_check_branch
        %120 = sbr.rel (%p118) target = $region16
      $region15: #{tpu_custom_call.1} parent=11 // pred_region
        _
      $region16: #{tpu_custom_call.1} parent=11 // pred_fallthru
        _
      // Predicated region
      $region17: #{tpu_custom_call.1} parent=11 // pred_check
        %p121 = pneg %p77
      $region18: #{tpu_custom_call.1} parent=11 // pred_check_branch
        %123 = sbr.rel (%p121) target = $region20
      $region19: #{tpu_custom_call.1} parent=11 // pred_region
        _
      $region20: #{tpu_custom_call.1} parent=11 // pred_fallthru
        _
    $region12: #{tpu_custom_call.1} parent=5 // pred_fallthru
      _
    %p124 = scmp.lt.s32.totalorder %s9, 2
    // Predicated region
    $region21: #{tpu_custom_call.1} parent=5 // pred_check
      %p125 = pneg %p124
    $region22: #{tpu_custom_call.1} parent=5 // pred_check_branch
      %127 = sbr.rel (%p125) target = $region24
    $region23: #{tpu_custom_call.1} parent=5 // pred_region
      // Predicated region
      $region25: #{tpu_custom_call.1} parent=23 // pred_check
        %p128 = pneg %p29
      $region26: #{tpu_custom_call.1} parent=23 // pred_check_branch
        %130 = sbr.rel (%p128) target = $region28
      $region27: #{tpu_custom_call.1} parent=23 // pred_region
        %s131 = smul.u32 8, %s9
        %p132 = scmp.lt.s32.totalorder %s131, 15
        %s133 = scalar_select %p132, %s131, 15
        %s134 = smul.addr %s133, 4
        %s135 = scalar_lea.vmem %s0, %s134
        %s136 = smul.u32 8, %s9
      $region28: #{tpu_custom_call.1} parent=23 // pred_fallthru
        _
    $region24: #{tpu_custom_call.1} parent=5 // pred_fallthru
      _
    %p137 = scmp.le.s32.totalorder 1, %s9
    %p138 = scmp.lt.s32.totalorder %s9, 3
    %p139 = pnand %p137, %p138
    %p140 = pneg %p139
    // Predicated region
    $region29: #{tpu_custom_call.1} parent=5 // pred_check
      _
    $region30: #{tpu_custom_call.1} parent=5 // pred_check_branch
      %142 = sbr.rel (%p139) target = $region32
    $region31: #{tpu_custom_call.1} parent=5 // pred_region
      %s143 = ssub.s32 %s9, 1
      %s144 = smul.u32 8, %s14
      %p145 = scmp.lt.s32.totalorder %s144, 15
      %s146 = scalar_select %p145, %s144, 15
      %s147 = smul.addr %s146, 4
      %s148 = scalar_lea.vmem %s0, %s147
      %p149 = pneg %p35
      %p150 = pneg %p32
      %p151 = pneg %p56
      %p152 = pneg %p53
      %p153 = pneg %p77
      %p154 = pneg %p74
      %p155 = pneg %p103
      %p156 = pneg %p100
      %s157 = smul.u32 8, %s14
      %p158 = scmp.lt.s32.totalorder %s157, 15
      %s159 = scalar_select %p158, %s157, 15
      %s160 = smul.addr %s159, 8
      %s161 = scalar_lea.vmem %s3, %s160
      %s162 = smul.u32 8, %s14
      %p163 = scmp.lt.s32.totalorder %s162, 15
      %s164 = scalar_select %p163, %s162, 15
      %s165 = smul.addr %s164, 4
      %s166 = scalar_lea.vmem %s0, %s165
      %s167 = smul.u32 8, %s14
      %s168 = smul.u32 8, %s14
      %p169 = scmp.lt.s32.totalorder %s168, 15
      %s170 = scalar_select %p169, %s168, 15
      %s171 = smul.addr %s170, 8
      %s172 = scalar_lea.vmem %s3, %s171
      %s173 = smul.u32 8, %s14
      %v175 = vld [vmem:[%s166] sm:$0xf]
      %v176 = vld [vmem:[%s166 + $0x4] sm:$0xf]
      %v177 = vld [vmem:[%s166 + $0x8] sm:$0xf]
      %v178 = vld [vmem:[%s166 + $0xc] sm:$0xf]
      %v179 = vld [vmem:[%s166 + $0x10] sm:$0xf]
      %v180 = vld [vmem:[%s166 + $0x14] sm:$0xf]
      %v181 = vld [vmem:[%s166 + $0x18] sm:$0xf]
      %v182 = vld [vmem:[%s166 + $0x1c] sm:$0xf]
      %v183 = vld [vmem:[%s1] sm:$0x3]
      %v184 = vld [vmem:[%s2] sm:$0x1]
      %v186 = vlaneseq
      %v187 = vshrl.u32 %v186, 7
      %v188 = vsub.s32 0, %v187
      %v189 = vrot.slane %v184, %v188
      %v199 = vunpack.c.l.b16 %v175
      %v200 = vunpack.c.l.b16 %v176
      %v201 = vunpack.c.l.b16 %v177
      %v202 = vunpack.c.l.b16 %v178
      %v203 = vunpack.c.l.b16 %v179
      %v204 = vunpack.c.l.b16 %v180
      %v205 = vunpack.c.l.b16 %v181
      %v206 = vunpack.c.l.b16 %v182
      %v207 = vpack.c.b16 %v200, %v199
      %v208 = vpack.c.b16 %v202, %v201
      %v209 = vpack.c.b16 %v204, %v203
      %v210 = vpack.c.b16 %v206, %v205
      %vm211 = vcmask 31744
      %v213 = vsel %vm211, %v207, 0
      %v216 = vsel %vm211, %v208, 0
      %v219 = vsel %vm211, %v209, 0
      %v222 = vsel %vm211, %v210, 0
      %vm224 = vcmask 1041408
      %v226 = vsel %vm224, %v183, 0
      %228 = vmatprep.subr.bf16.mxu0 0
      %229 = vmatpush1.bf16.msra.mxu0 %v226
      %230 = vmatprep.subr.bf16.mxu0 0
      %231 = vmatpush1.bf16.msra.mxu0 0
      %232 = vmatprep.subr.bf16.mxu0 0
      %233 = vmatpush1.bf16.msra.mxu0 0
      %234 = vmatprep.subr.bf16.mxu0 0
      %235 = vmatpush1.bf16.msra.mxu0 0
      %236 = vmatprep.subr.bf16.mxu0 0
      %237 = vmatpush1.bf16.msra.mxu0 0
      %238 = vmatprep.subr.bf16.mxu0 0
      %239 = vmatpush1.bf16.msra.mxu0 0
      %240 = vmatprep.subr.bf16.mxu0 0
      %241 = vmatpush1.bf16.msra.mxu0 0
      %242 = vmatprep.subr.bf16.mxu0 0
      %243 = vmatpush1.bf16.msra.mxu0 0
      %244 = vmatprep.subr.bf16.mxu0 0
      %245 = vmatpush1.bf16.msra.mxu0 0
      %246 = vmatprep.subr.bf16.mxu0 0
      %247 = vmatpush1.bf16.msra.mxu0 0
      %248 = vmatprep.subr.bf16.mxu0 0
      %249 = vmatpush1.bf16.msra.mxu0 0
      %250 = vmatprep.subr.bf16.mxu0 0
      %251 = vmatpush1.bf16.msra.mxu0 0
      %252 = vmatprep.subr.bf16.mxu0 0
      %253 = vmatpush1.bf16.msra.mxu0 0
      %254 = vmatprep.subr.bf16.mxu0 0
      %255 = vmatpush1.bf16.msra.mxu0 0
      %256 = vmatprep.subr.bf16.mxu0 0
      %257 = vmatpush1.bf16.msra.mxu0 0
      %258 = vmatprep.subr.bf16.mxu0 0
      %259 = vmatpush1.bf16.msra.mxu0 0
      %260 = vmatprep.mubr.bf16.mxu0 0
      %261 = vmatmul.mubr.bf16.gmra.mrb[0].mxu0 %v213
      %v262 = vpop.f32.mrb[0].mxu0
      %v263 = vadd.f32 %v189, %v262
      %v264 = vpop.f32.mrb[0].mxu0
      %v265 = vpop.f32.mrb[0].mxu0
      %v266 = vadd.f32 %v189, %v265
      %v267 = vpop.f32.mrb[0].mxu0
      %268 = vmatprep.mubr.bf16.mxu0 0
      %269 = vmatmul.mubr.bf16.gmra.mrb[0].mxu0 %v216
      %v270 = vpop.f32.mrb[0].mxu0
      %v271 = vadd.f32 %v189, %v270
      %v272 = vpop.f32.mrb[0].mxu0
      %v273 = vpop.f32.mrb[0].mxu0
      %v274 = vadd.f32 %v189, %v273
      %v275 = vpop.f32.mrb[0].mxu0
      %276 = vmatprep.mubr.bf16.mxu0 0
      %277 = vmatmul.mubr.bf16.gmra.mrb[0].mxu0 %v219
      %v278 = vpop.f32.mrb[0].mxu0
      %v279 = vadd.f32 %v189, %v278
      %v280 = vpop.f32.mrb[0].mxu0
      %v281 = vpop.f32.mrb[0].mxu0
      %v282 = vadd.f32 %v189, %v281
      %v283 = vpop.f32.mrb[0].mxu0
      %284 = vmatprep.mubr.bf16.mxu0 0
      %285 = vmatmul.mubr.bf16.gmra.mrb[0].mxu0 %v222
      %v286 = vpop.f32.mrb[0].mxu0
      %v287 = vadd.f32 %v189, %v286
      %v288 = vpop.f32.mrb[0].mxu0
      %v289 = vpop.f32.mrb[0].mxu0
      %v290 = vadd.f32 %v189, %v289
      %v291 = vpop.f32.mrb[0].mxu0
      %292 = vdwg.mxu0
      %vm293 = vcmask 261120
      %294 = vst.msk [vmem:[%s172] sm:$0xff] %vm293, %v263
      %295 = vst.msk [vmem:[%s172 + $0x8] sm:$0xff] %vm293, %v266
      %296 = vst.msk [vmem:[%s172 + $0x10] sm:$0xff] %vm293, %v271
      %297 = vst.msk [vmem:[%s172 + $0x18] sm:$0xff] %vm293, %v274
      %298 = vst.msk [vmem:[%s172 + $0x20] sm:$0xff] %vm293, %v279
      %299 = vst.msk [vmem:[%s172 + $0x28] sm:$0xff] %vm293, %v282
      %300 = vst.msk [vmem:[%s172 + $0x30] sm:$0xff] %vm293, %v287
      %301 = vst.msk [vmem:[%s172 + $0x38] sm:$0xff] %vm293, %v290
      %s302 = smul.u32 8, %s14
      %p303 = scmp.lt.s32.totalorder %s302, 15
      %s304 = scalar_select %p303, %s302, 15
      %s305 = smul.addr %s304, 8
      %s306 = scalar_lea.vmem %s3, %s305
      // Predicated region
      $region33: #{tpu_custom_call.1} parent=31 // pred_check
        %p307 = pneg %p100
      $region34: #{tpu_custom_call.1} parent=31 // pred_check_branch
        %309 = sbr.rel (%p307) target = $region36
      $region35: #{tpu_custom_call.1} parent=31 // pred_region
        %s310 = smul.u32 8, %s14
      $region36: #{tpu_custom_call.1} parent=31 // pred_fallthru
        _
    $region32: #{tpu_custom_call.1} parent=5 // pred_fallthru
      _
    %p311 = scmp.le.s32.totalorder 2, %s9
    // Predicated region
    $region37: #{tpu_custom_call.1} parent=5 // pred_check
      %p312 = pneg %p311
    $region38: #{tpu_custom_call.1} parent=5 // pred_check_branch
      %314 = sbr.rel (%p312) target = $region40
    $region39: #{tpu_custom_call.1} parent=5 // pred_region
      %s315 = ssub.s32 %s9, 2
      // Predicated region
      $region41: #{tpu_custom_call.1} parent=39 // pred_check
        %p316 = pneg %p106
      $region42: #{tpu_custom_call.1} parent=39 // pred_check_branch
        %318 = sbr.rel (%p316) target = $region44
      $region43: #{tpu_custom_call.1} parent=39 // pred_region
        %s319 = smul.u32 8, %s15
        %p320 = scmp.lt.s32.totalorder %s319, 15
        %s321 = scalar_select %p320, %s319, 15
        %s322 = smul.addr %s321, 8
        %s323 = scalar_lea.vmem %s3, %s322
      $region44: #{tpu_custom_call.1} parent=39 // pred_fallthru
        _
    $region40: #{tpu_custom_call.1} parent=5 // pred_fallthru
      _
  $region6: #{tpu_custom_call.1} parent=0 // loop_footer
    %s13 = sadd.s32 1, %s9
  $region7: #{tpu_custom_call.1} parent=0 // loop_footer_branch
    %8 = sbr.rel target = $region3
  $region8: #{tpu_custom_call.1} parent=0 // loop_exit
    _

</llo_original>
